<compile_context>
chip_gen: v7x
topology: tpu7x:2x2x1
jax: 0.10.0
libtpu: 0.0.40
codegen_flags: <defaults>
</compile_context>

<pallas_src>
import functools

import jax
import jax.numpy as jnp
from jax.experimental import pallas as pl
from jax.experimental.pallas import tpu as pltpu


def _tf_spg_kernel(x_ref, wf_ref, bf_ref, w2_ref, b2_ref, w_ref, b_ref, out_ref):
    # h = relu(x @ Wf + bf)        (fused ln_day + ln_week + ln1)
    h = jnp.dot(x_ref[...], wf_ref[...],
                preferred_element_type=jnp.float32) + bf_ref[...]
    h = jnp.maximum(h, 0.0)
    # h = relu(h @ W2 + b2)        (ln2)
    h = jnp.dot(h, w2_ref[...],
                preferred_element_type=jnp.float32) + b2_ref[...]
    h = jnp.maximum(h, 0.0)
    # out = h @ W + b              (ln)
    out = jnp.dot(h, w_ref[...],
                  preferred_element_type=jnp.float32) + b_ref[...]
    out_ref[...] = out.astype(out_ref.dtype)


@functools.partial(jax.jit, static_argnames=("row_tile",))
def time_feature_spg_forward(eb, params, *, row_tile=4096):
    """eb: [B, T, 2, 12] float32  ->  [B, T, E] float32."""
    B, T, two, F = eb.shape
    assert two == 2 and F == 12
    E = params["w_day"].shape[1]
    N = B * T

    # Free row-major view: the (2, 12) trailing dims are contiguous -> [N, 24].
    x = eb.reshape(N, 2 * F)

    # One-time weight folding (wrapper-side, negligible cost).
    w_daywk = jnp.concatenate([params["w_day"], params["w_week"]], axis=0)  # [24, E]
    b_daywk = params["b_day"] + params["b_week"]                            # [1, E]
    w_fused = w_daywk @ params["w1"]                                        # [24, E]
    b_fused = b_daywk @ params["w1"] + params["b1"]                         # [1, E]

    # Row tiling: full-array block when small, else large multiple-of-8 tiles.
    TM = N if N <= row_tile else row_tile
    grid = (pl.cdiv(N, TM),)

    x_spec = pl.BlockSpec((TM, 2 * F), lambda i: (i, 0))
    out_spec = pl.BlockSpec((TM, E), lambda i: (i, 0))
    # Weights/biases resident across all grid steps (constant block index).
    w_in_spec = lambda r, c: pl.BlockSpec((r, c), lambda i: (0, 0))

    flops = 2 * N * (2 * F * E + 2 * E * E)
    bytes_accessed = 4 * (N * (2 * F + E)            # activations in/out
                          + (2 * F * E + 2 * E * E)  # weights
                          + 3 * E)                   # biases

    out = pl.pallas_call(
        _tf_spg_kernel,
        out_shape=jax.ShapeDtypeStruct((N, E), jnp.float32),
        grid=grid,
        in_specs=[
            x_spec,
            w_in_spec(2 * F, E), w_in_spec(1, E),   # fused input layer
            w_in_spec(E, E),     w_in_spec(1, E),   # ln2
            w_in_spec(E, E),     w_in_spec(1, E),   # ln
        ],
        out_specs=out_spec,
        compiler_params=pltpu.CompilerParams(
            dimension_semantics=("parallel",),       # shards rows across v7x's 2 TCs
            vmem_limit_bytes=32 * 1024 * 1024,
        ),
        cost_estimate=pl.CostEstimate(
            flops=flops, transcendentals=0, bytes_accessed=bytes_accessed),
    )(x, w_fused, b_fused, params["w2"], params["b2"], params["w"], params["b"])

    return out.reshape(B, T, E)


def init_params(key, embed_dim):
    """Deterministic init mimicking nn.Linear (uniform(-1/sqrt(fan_in), ...))."""
    def linear(k, fan_in, fan_out):
        k1, k2 = jax.random.split(k)
        bound = 1.0 / jnp.sqrt(fan_in)
        w = jax.random.uniform(k1, (fan_in, fan_out), jnp.float32, -bound, bound)
        b = jax.random.uniform(k2, (1, fan_out), jnp.float32, -bound, bound)
        return w, b

    ks = jax.random.split(key, 5)
    w_day, b_day = linear(ks[0], 12, embed_dim)
    w_week, b_week = linear(ks[1], 12, embed_dim)
    w1, b1 = linear(ks[2], embed_dim, embed_dim)
    w2, b2 = linear(ks[3], embed_dim, embed_dim)
    w, b = linear(ks[4], embed_dim, embed_dim)
    return dict(w_day=w_day, b_day=b_day, w_week=w_week, b_week=b_week,
                w1=w1, b1=b1, w2=w2, b2=b2, w=w, b=b)


def reference_forward(eb, p):
    """Plain-JAX reference matching the PyTorch forward (unfused)."""
    day = eb[:, :, 0, :] @ p["w_day"] + p["b_day"][0]
    week = eb[:, :, 1, :] @ p["w_week"] + p["b_week"][0]
    h = day + week
    h = jax.nn.relu(h @ p["w1"] + p["b1"][0])
    h = jax.nn.relu(h @ p["w2"] + p["b2"][0])
    return h @ p["w"] + p["b"][0]


if __name__ == "__main__":
    B, T, E = 2, 8, 32
    key = jax.random.PRNGKey(0)
    k_in, k_par = jax.random.split(key)

    eb = jax.random.normal(k_in, (B, T, 2, 12), dtype=jnp.float32)
    params = init_params(k_par, E)

    out = time_feature_spg_forward(eb, params)
    out = jax.block_until_ready(out)

    ref = reference_forward(eb, params)
    assert out.shape == (B, T, E)
    # W1-folding reassociates the first accumulation -> allow tiny fp drift.
    assert jnp.allclose(out, ref, atol=1e-4, rtol=1e-4), (
        float(jnp.max(jnp.abs(out - ref))))

    print("KERNEL_OK")
</pallas_src>

<mosaic_0001>
module attributes {stable_mosaic.version = 11 : i64} {
  func.func @_tf_spg_kernel(%arg0: i32, %arg1: memref<16x24xf32, #tpu.memory_space<vmem>>, %arg2: memref<24x32xf32, #tpu.memory_space<vmem>>, %arg3: memref<1x32xf32, #tpu.memory_space<vmem>>, %arg4: memref<32x32xf32, #tpu.memory_space<vmem>>, %arg5: memref<1x32xf32, #tpu.memory_space<vmem>>, %arg6: memref<32x32xf32, #tpu.memory_space<vmem>>, %arg7: memref<1x32xf32, #tpu.memory_space<vmem>>, %arg8: memref<16x32xf32, #tpu.memory_space<vmem>>) attributes {dimension_semantics = [#tpu.dimension_semantics<parallel>], iteration_bounds = array<i64: 1>, scalar_prefetch = 0 : i64, scratch_operands = 0 : i64, tpu.core_type = #tpu.core_type<tc>, window_params = [{transform_indices = @transform_0, window_bounds = array<i64: 16, 24>}, {pipeline_mode = #tpu.pipeline_mode<synchronous>, transform_indices = @transform_1, window_bounds = array<i64: 24, 32>}, {pipeline_mode = #tpu.pipeline_mode<synchronous>, transform_indices = @transform_2, window_bounds = array<i64: 1, 32>}, {pipeline_mode = #tpu.pipeline_mode<synchronous>, transform_indices = @transform_3, window_bounds = array<i64: 32, 32>}, {pipeline_mode = #tpu.pipeline_mode<synchronous>, transform_indices = @transform_4, window_bounds = array<i64: 1, 32>}, {pipeline_mode = #tpu.pipeline_mode<synchronous>, transform_indices = @transform_5, window_bounds = array<i64: 32, 32>}, {pipeline_mode = #tpu.pipeline_mode<synchronous>, transform_indices = @transform_6, window_bounds = array<i64: 1, 32>}, {transform_indices = @transform_7, window_bounds = array<i64: 16, 32>}]} {
    %c0 = arith.constant 0 : index
    %c0_0 = arith.constant 0 : index
    %0 = vector.load %arg1[%c0, %c0_0] : memref<16x24xf32, #tpu.memory_space<vmem>>, vector<16x24xf32>
    %c0_1 = arith.constant 0 : index
    %c0_2 = arith.constant 0 : index
    %1 = vector.load %arg2[%c0_1, %c0_2] : memref<24x32xf32, #tpu.memory_space<vmem>>, vector<24x32xf32>
    %cst = arith.constant dense<0.000000e+00> : vector<16x32xf32>
    %2 = tpu.matmul %0, %1, %cst {dimension_numbers = #tpu.dot_dimension_numbers<[1], [0], [0], [1], [0, 0, 1, 1], [], []>} : vector<16x24xf32>, vector<24x32xf32>, vector<16x32xf32> -> vector<16x32xf32>
    %c0_3 = arith.constant 0 : index
    %c0_4 = arith.constant 0 : index
    %3 = vector.load %arg3[%c0_3, %c0_4] : memref<1x32xf32, #tpu.memory_space<vmem>>, vector<1x32xf32>
    %4 = vector.broadcast %3 : vector<1x32xf32> to vector<16x32xf32>
    %5 = arith.addf %2, %4 : vector<16x32xf32>
    %cst_5 = arith.constant 0.000000e+00 : f32
    %6 = vector.broadcast %cst_5 : f32 to vector<16x32xf32>
    %7 = arith.maximumf %5, %6 : vector<16x32xf32>
    %c0_6 = arith.constant 0 : index
    %c0_7 = arith.constant 0 : index
    %8 = vector.load %arg4[%c0_6, %c0_7] : memref<32x32xf32, #tpu.memory_space<vmem>>, vector<32x32xf32>
    %cst_8 = arith.constant dense<0.000000e+00> : vector<16x32xf32>
    %9 = tpu.matmul %7, %8, %cst_8 {dimension_numbers = #tpu.dot_dimension_numbers<[1], [0], [0], [1], [0, 0, 1, 1], [], []>} : vector<16x32xf32>, vector<32x32xf32>, vector<16x32xf32> -> vector<16x32xf32>
    %c0_9 = arith.constant 0 : index
    %c0_10 = arith.constant 0 : index
    %10 = vector.load %arg5[%c0_9, %c0_10] : memref<1x32xf32, #tpu.memory_space<vmem>>, vector<1x32xf32>
    %11 = vector.broadcast %10 : vector<1x32xf32> to vector<16x32xf32>
    %12 = arith.addf %9, %11 : vector<16x32xf32>
    %cst_11 = arith.constant 0.000000e+00 : f32
    %13 = vector.broadcast %cst_11 : f32 to vector<16x32xf32>
    %14 = arith.maximumf %12, %13 : vector<16x32xf32>
    %c0_12 = arith.constant 0 : index
    %c0_13 = arith.constant 0 : index
    %15 = vector.load %arg6[%c0_12, %c0_13] : memref<32x32xf32, #tpu.memory_space<vmem>>, vector<32x32xf32>
    %cst_14 = arith.constant dense<0.000000e+00> : vector<16x32xf32>
    %16 = tpu.matmul %14, %15, %cst_14 {dimension_numbers = #tpu.dot_dimension_numbers<[1], [0], [0], [1], [0, 0, 1, 1], [], []>} : vector<16x32xf32>, vector<32x32xf32>, vector<16x32xf32> -> vector<16x32xf32>
    %c0_15 = arith.constant 0 : index
    %c0_16 = arith.constant 0 : index
    %17 = vector.load %arg7[%c0_15, %c0_16] : memref<1x32xf32, #tpu.memory_space<vmem>>, vector<1x32xf32>
    %18 = vector.broadcast %17 : vector<1x32xf32> to vector<16x32xf32>
    %19 = arith.addf %16, %18 : vector<16x32xf32>
    %c0_17 = arith.constant 0 : index
    %c0_18 = arith.constant 0 : index
    %20 = vector.load %arg8[%c0_17, %c0_18] : memref<16x32xf32, #tpu.memory_space<vmem>>, vector<16x32xf32>
    tpu.vector_store %arg8[%c0_17, %c0_18], %19 {strides = array<i32>} : memref<16x32xf32, #tpu.memory_space<vmem>>, vector<16x32xf32>,
    return
  }
  func.func @transform_0(%arg0: i32) -> (i32, i32) {
    %c0_i32 = arith.constant 0 : i32
    %c0_i32_0 = arith.constant 0 : i32
    return %arg0, %c0_i32 : i32, i32
  }
  func.func @transform_1(%arg0: i32) -> (i32, i32) {
    %c0_i32 = arith.constant 0 : i32
    %c0_i32_0 = arith.constant 0 : i32
    %c0_i32_1 = arith.constant 0 : i32
    return %c0_i32, %c0_i32_0 : i32, i32
  }
  func.func @transform_2(%arg0: i32) -> (i32, i32) {
    %c0_i32 = arith.constant 0 : i32
    %c0_i32_0 = arith.constant 0 : i32
    %c0_i32_1 = arith.constant 0 : i32
    return %c0_i32, %c0_i32_0 : i32, i32
  }
  func.func @transform_3(%arg0: i32) -> (i32, i32) {
    %c0_i32 = arith.constant 0 : i32
    %c0_i32_0 = arith.constant 0 : i32
    %c0_i32_1 = arith.constant 0 : i32
    return %c0_i32, %c0_i32_0 : i32, i32
  }
  func.func @transform_4(%arg0: i32) -> (i32, i32) {
    %c0_i32 = arith.constant 0 : i32
    %c0_i32_0 = arith.constant 0 : i32
    %c0_i32_1 = arith.constant 0 : i32
    return %c0_i32, %c0_i32_0 : i32, i32
  }
  func.func @transform_5(%arg0: i32) -> (i32, i32) {
    %c0_i32 = arith.constant 0 : i32
    %c0_i32_0 = arith.constant 0 : i32
    %c0_i32_1 = arith.constant 0 : i32
    return %c0_i32, %c0_i32_0 : i32, i32
  }
  func.func @transform_6(%arg0: i32) -> (i32, i32) {
    %c0_i32 = arith.constant 0 : i32
    %c0_i32_0 = arith.constant 0 : i32
    %c0_i32_1 = arith.constant 0 : i32
    return %c0_i32, %c0_i32_0 : i32, i32
  }
  func.func @transform_7(%arg0: i32) -> (i32, i32) {
    %c0_i32 = arith.constant 0 : i32
    %c0_i32_0 = arith.constant 0 : i32
    return %arg0, %c0_i32 : i32, i32
  }
}

</mosaic_0001>

<llo_original>
// kernel: time_feature_spg_forward.1
$region0: #{time_feature_spg_forward.1}
  #allocation0 [shape = 'u32[]', space=smem, size = 0x4, offset = 0x4, fixed_abs, tag = 'smem constant byte address 0x4 - core index']
  #allocation1 [shape = 'u32[144,128]{1,0:T(1,128)}', space=vmem, size = 0x12000, scoped, tag = 'internal scratch']
  %s0 = inlined_call_operand.vmem [shape: f32[16,24], index: 0, kind: input, shape index: {}]
  %s1 = inlined_call_operand.vmem [shape: f32[24,32], index: 1, kind: input, shape index: {}]
  %s2 = inlined_call_operand.vmem [shape: f32[1,32], index: 2, kind: input, shape index: {}]
  %s3 = inlined_call_operand.vmem [shape: f32[32,32], index: 3, kind: input, shape index: {}]
  %s4 = inlined_call_operand.vmem [shape: f32[1,32], index: 4, kind: input, shape index: {}]
  %s5 = inlined_call_operand.vmem [shape: f32[32,32], index: 5, kind: input, shape index: {}]
  %s6 = inlined_call_operand.vmem [shape: f32[1,32], index: 6, kind: input, shape index: {}]
  %s7 = inlined_call_operand.hbm [shape: f32[16,32], index: 7, kind: output, shape index: {}]
  %s8 = sld [smem:[#allocation0]]
  $region38: #{time_feature_spg_forward.1} parent=0
    _
  %s10 = ssub.s32 1, %s8
  %s11 = scalar_select 0, %s10, %s8
  $region1: #{time_feature_spg_forward.1} parent=0
    #allocation2 [shape = 'u8[8192]{0}', space=vmem, size = 0x2000, scoped, tag = 'output window, operand 0, single buffered']
    #allocation3 [shape = 's32[1]{0}', space=sflag, size = 0x4, scoped, tag = 'scoped memory for time_feature_spg_forward.1']
    %12 = vsyncpa [#allocation3], 0
    // Predicated region
    $region2: #{time_feature_spg_forward.1} parent=1 // pred_check
      _
    $region3: #{time_feature_spg_forward.1} parent=1 // pred_check_branch
      %14 = sbr.rel (0) target = $region5
    $region4: #{time_feature_spg_forward.1} parent=1 // pred_region
      _
    $region5: #{time_feature_spg_forward.1} parent=1 // pred_fallthru
      _
    // Predicated region
    $region6: #{time_feature_spg_forward.1} parent=1 // pred_check
      _
    $region7: #{time_feature_spg_forward.1} parent=1 // pred_check_branch
      %16 = sbr.rel (0) target = $region9
    $region8: #{time_feature_spg_forward.1} parent=1 // pred_region
      _
    $region9: #{time_feature_spg_forward.1} parent=1 // pred_fallthru
      _
    // Predicated region
    $region10: #{time_feature_spg_forward.1} parent=1 // pred_check
      _
    $region11: #{time_feature_spg_forward.1} parent=1 // pred_check_branch
      %18 = sbr.rel (0) target = $region13
    $region12: #{time_feature_spg_forward.1} parent=1 // pred_region
      _
    $region13: #{time_feature_spg_forward.1} parent=1 // pred_fallthru
      _
    // Predicated region
    $region14: #{time_feature_spg_forward.1} parent=1 // pred_check
      _
    $region15: #{time_feature_spg_forward.1} parent=1 // pred_check_branch
      %20 = sbr.rel (0) target = $region17
    $region16: #{time_feature_spg_forward.1} parent=1 // pred_region
      _
    $region17: #{time_feature_spg_forward.1} parent=1 // pred_fallthru
      _
    // Predicated region
    $region18: #{time_feature_spg_forward.1} parent=1 // pred_check
      _
    $region19: #{time_feature_spg_forward.1} parent=1 // pred_check_branch
      %22 = sbr.rel (0) target = $region21
    $region20: #{time_feature_spg_forward.1} parent=1 // pred_region
      _
    $region21: #{time_feature_spg_forward.1} parent=1 // pred_fallthru
      _
    // Predicated region
    $region22: #{time_feature_spg_forward.1} parent=1 // pred_check
      _
    $region23: #{time_feature_spg_forward.1} parent=1 // pred_check_branch
      %24 = sbr.rel (0) target = $region25
    $region24: #{time_feature_spg_forward.1} parent=1 // pred_region
      _
    $region25: #{time_feature_spg_forward.1} parent=1 // pred_fallthru
      _
    // Predicated region
    $region26: #{time_feature_spg_forward.1} parent=1 // pred_check
      _
    $region27: #{time_feature_spg_forward.1} parent=1 // pred_check_branch
      %26 = sbr.rel (0) target = $region29
    $region28: #{time_feature_spg_forward.1} parent=1 // pred_region
      _
    $region29: #{time_feature_spg_forward.1} parent=1 // pred_fallthru
      _
    %v27 = vld [vmem:[%s0] sm:$0xff]
    %v28 = vld [vmem:[%s0 + $0x8] sm:$0xff]
    %v29 = vld [vmem:[%s1] sm:$0xff]
    %v30 = vld [vmem:[%s1 + $0x8] sm:$0xff]
    %v31 = vld [vmem:[%s1 + $0x10] sm:$0xff]
    %v32 = vld [vmem:[%s2] sm:$0x1]
    %v34 = vlaneseq
    %v35 = vshrl.u32 %v34, 7
    %v36 = vsub.s32 0, %v35
    %v37 = vrot.slane %v32, %v36
    %vm39 = vcmask 195584
    %v41 = vsel %vm39, %v27, 0
    %v44 = vsel %vm39, %v28, 0
    %46 = vmatprep.subr.mxu0 0.0
    %47 = vmatpush1.msra.mxu0 %v29
    %48 = vmatprep.subr.mxu0 0.0
    %49 = vmatpush1.msra.mxu0 %v30
    %50 = vmatprep.subr.mxu0 0.0
    %51 = vmatpush1.msra.mxu0 %v31
    %52 = vmatprep.subr.mxu0 0.0
    %53 = vmatpush1.msra.mxu0 0.0
    %54 = vmatprep.subr.mxu0 0.0
    %55 = vmatpush1.msra.mxu0 0.0
    %56 = vmatprep.subr.mxu0 0.0
    %57 = vmatpush1.msra.mxu0 0.0
    %58 = vmatprep.subr.mxu0 0.0
    %59 = vmatpush1.msra.mxu0 0.0
    %60 = vmatprep.subr.mxu0 0.0
    %61 = vmatpush1.msra.mxu0 0.0
    %62 = vmatprep.subr.mxu0 0.0
    %63 = vmatpush1.msra.mxu0 0.0
    %64 = vmatprep.subr.mxu0 0.0
    %65 = vmatpush1.msra.mxu0 0.0
    %66 = vmatprep.subr.mxu0 0.0
    %67 = vmatpush1.msra.mxu0 0.0
    %68 = vmatprep.subr.mxu0 0.0
    %69 = vmatpush1.msra.mxu0 0.0
    %70 = vmatprep.subr.mxu0 0.0
    %71 = vmatpush1.msra.mxu0 0.0
    %72 = vmatprep.subr.mxu0 0.0
    %73 = vmatpush1.msra.mxu0 0.0
    %74 = vmatprep.subr.mxu0 0.0
    %75 = vmatpush1.msra.mxu0 0.0
    %76 = vmatprep.subr.mxu0 0.0
    %77 = vmatpush1.msra.mxu0 0.0
    %78 = vmatprep.subr.mxu0 0.0
    %79 = vmatpush1.msra.mxu0 0.0
    %80 = vmatprep.subr.mxu0 0.0
    %81 = vmatpush1.msra.mxu0 0.0
    %82 = vmatprep.subr.mxu0 0.0
    %83 = vmatpush1.msra.mxu0 0.0
    %84 = vmatprep.subr.mxu0 0.0
    %85 = vmatpush1.msra.mxu0 0.0
    %86 = vmatprep.subr.mxu0 0.0
    %87 = vmatpush1.msra.mxu0 0.0
    %88 = vmatprep.subr.mxu0 0.0
    %89 = vmatpush1.msra.mxu0 0.0
    %90 = vmatprep.subr.mxu0 0.0
    %91 = vmatpush1.msra.mxu0 0.0
    %92 = vmatprep.subr.mxu0 0.0
    %93 = vmatpush1.msra.mxu0 0.0
    %94 = vmatprep.subr.mxu0 0.0
    %95 = vmatpush1.msra.mxu0 0.0
    %96 = vmatprep.subr.mxu0 0.0
    %97 = vmatpush1.msra.mxu0 0.0
    %98 = vmatprep.subr.mxu0 0.0
    %99 = vmatpush1.msra.mxu0 0.0
    %100 = vmatprep.subr.mxu0 0.0
    %101 = vmatpush1.msra.mxu0 0.0
    %102 = vmatprep.subr.mxu0 0.0
    %103 = vmatpush1.msra.mxu0 0.0
    %104 = vmatprep.subr.mxu0 0.0
    %105 = vmatpush1.msra.mxu0 0.0
    %106 = vmatprep.subr.mxu0 0.0
    %107 = vmatpush1.msra.mxu0 0.0
    %108 = vmatprep.subr.mxu0 0.0
    %109 = vmatpush1.msra.mxu0 0.0
    %110 = vmatprep.mubr.f32.mxu0 0.0
    %111 = vmatmul.mubr.f32.gmra.mrb[0].mxu0 %v41
    %v112 = vpop.f32.mrb[0].mxu0
    %v113 = vadd.f32 %v37, %v112
    %v114 = vpop.f32.mrb[0].mxu0
    %115 = vmatprep.mubr.f32.mxu0 0.0
    %116 = vmatmul.mubr.f32.gmra.mrb[0].mxu0 %v44
    %v117 = vpop.f32.mrb[0].mxu0
    %v118 = vadd.f32 %v37, %v117
    %v119 = vpop.f32.mrb[0].mxu0
    %120 = vdwg.mxu0
    %v121 = vmax.f32 %v113, 0.0
    %v122 = vmax.f32 %v118, 0.0
    %v123 = vld [vmem:[%s3] sm:$0xff]
    %v124 = vld [vmem:[%s3 + $0x8] sm:$0xff]
    %v125 = vld [vmem:[%s3 + $0x10] sm:$0xff]
    %v126 = vld [vmem:[%s3 + $0x18] sm:$0xff]
    %v127 = vld [vmem:[%s4] sm:$0x1]
    %v129 = vlaneseq
    %v130 = vshrl.u32 %v129, 7
    %v131 = vsub.s32 0, %v130
    %v132 = vrot.slane %v127, %v131
    %vm134 = vcmask 261120
    %v136 = vsel %vm134, %v121, 0
    %v139 = vsel %vm134, %v122, 0
    %141 = vmatprep.subr.mxu0 0.0
    %142 = vmatpush1.msra.mxu0 %v123
    %143 = vmatprep.subr.mxu0 0.0
    %144 = vmatpush1.msra.mxu0 %v124
    %145 = vmatprep.subr.mxu0 0.0
    %146 = vmatpush1.msra.mxu0 %v125
    %147 = vmatprep.subr.mxu0 0.0
    %148 = vmatpush1.msra.mxu0 %v126
    %149 = vmatprep.subr.mxu0 0.0
    %150 = vmatpush1.msra.mxu0 0.0
    %151 = vmatprep.subr.mxu0 0.0
    %152 = vmatpush1.msra.mxu0 0.0
    %153 = vmatprep.subr.mxu0 0.0
    %154 = vmatpush1.msra.mxu0 0.0
    %155 = vmatprep.subr.mxu0 0.0
    %156 = vmatpush1.msra.mxu0 0.0
    %157 = vmatprep.subr.mxu0 0.0
    %158 = vmatpush1.msra.mxu0 0.0
    %159 = vmatprep.subr.mxu0 0.0
    %160 = vmatpush1.msra.mxu0 0.0
    %161 = vmatprep.subr.mxu0 0.0
    %162 = vmatpush1.msra.mxu0 0.0
    %163 = vmatprep.subr.mxu0 0.0
    %164 = vmatpush1.msra.mxu0 0.0
    %165 = vmatprep.subr.mxu0 0.0
    %166 = vmatpush1.msra.mxu0 0.0
    %167 = vmatprep.subr.mxu0 0.0
    %168 = vmatpush1.msra.mxu0 0.0
    %169 = vmatprep.subr.mxu0 0.0
    %170 = vmatpush1.msra.mxu0 0.0
    %171 = vmatprep.subr.mxu0 0.0
    %172 = vmatpush1.msra.mxu0 0.0
    %173 = vmatprep.subr.mxu0 0.0
    %174 = vmatpush1.msra.mxu0 0.0
    %175 = vmatprep.subr.mxu0 0.0
    %176 = vmatpush1.msra.mxu0 0.0
    %177 = vmatprep.subr.mxu0 0.0
    %178 = vmatpush1.msra.mxu0 0.0
    %179 = vmatprep.subr.mxu0 0.0
    %180 = vmatpush1.msra.mxu0 0.0
    %181 = vmatprep.subr.mxu0 0.0
    %182 = vmatpush1.msra.mxu0 0.0
    %183 = vmatprep.subr.mxu0 0.0
    %184 = vmatpush1.msra.mxu0 0.0
    %185 = vmatprep.subr.mxu0 0.0
    %186 = vmatpush1.msra.mxu0 0.0
    %187 = vmatprep.subr.mxu0 0.0
    %188 = vmatpush1.msra.mxu0 0.0
    %189 = vmatprep.subr.mxu0 0.0
    %190 = vmatpush1.msra.mxu0 0.0
    %191 = vmatprep.subr.mxu0 0.0
    %192 = vmatpush1.msra.mxu0 0.0
    %193 = vmatprep.subr.mxu0 0.0
    %194 = vmatpush1.msra.mxu0 0.0
    %195 = vmatprep.subr.mxu0 0.0
    %196 = vmatpush1.msra.mxu0 0.0
    %197 = vmatprep.subr.mxu0 0.0
    %198 = vmatpush1.msra.mxu0 0.0
    %199 = vmatprep.subr.mxu0 0.0
    %200 = vmatpush1.msra.mxu0 0.0
    %201 = vmatprep.subr.mxu0 0.0
    %202 = vmatpush1.msra.mxu0 0.0
    %203 = vmatprep.subr.mxu0 0.0
    %204 = vmatpush1.msra.mxu0 0.0
    %205 = vmatprep.mubr.f32.mxu0 0.0
    %206 = vmatmul.mubr.f32.gmra.mrb[0].mxu0 %v136
    %v207 = vpop.f32.mrb[0].mxu0
    %v208 = vadd.f32 %v132, %v207
    %v209 = vpop.f32.mrb[0].mxu0
    %210 = vmatprep.mubr.f32.mxu0 0.0
    %211 = vmatmul.mubr.f32.gmra.mrb[0].mxu0 %v139
    %v212 = vpop.f32.mrb[0].mxu0
    %v213 = vadd.f32 %v132, %v212
    %v214 = vpop.f32.mrb[0].mxu0
    %215 = vdwg.mxu0
    %v216 = vmax.f32 %v208, 0.0
    %v217 = vmax.f32 %v213, 0.0
    %v218 = vld [vmem:[%s5] sm:$0xff]
    %v219 = vld [vmem:[%s5 + $0x8] sm:$0xff]
    %v220 = vld [vmem:[%s5 + $0x10] sm:$0xff]
    %v221 = vld [vmem:[%s5 + $0x18] sm:$0xff]
    %v222 = vld [vmem:[%s6] sm:$0x1]
    %v224 = vlaneseq
    %v225 = vshrl.u32 %v224, 7
    %v226 = vsub.s32 0, %v225
    %v227 = vrot.slane %v222, %v226
    %v230 = vsel %vm134, %v216, 0
    %v233 = vsel %vm134, %v217, 0
    %235 = vmatprep.subr.mxu0 0.0
    %236 = vmatpush1.msra.mxu0 %v218
    %237 = vmatprep.subr.mxu0 0.0
    %238 = vmatpush1.msra.mxu0 %v219
    %239 = vmatprep.subr.mxu0 0.0
    %240 = vmatpush1.msra.mxu0 %v220
    %241 = vmatprep.subr.mxu0 0.0
    %242 = vmatpush1.msra.mxu0 %v221
    %243 = vmatprep.subr.mxu0 0.0
    %244 = vmatpush1.msra.mxu0 0.0
    %245 = vmatprep.subr.mxu0 0.0
    %246 = vmatpush1.msra.mxu0 0.0
    %247 = vmatprep.subr.mxu0 0.0
    %248 = vmatpush1.msra.mxu0 0.0
    %249 = vmatprep.subr.mxu0 0.0
    %250 = vmatpush1.msra.mxu0 0.0
    %251 = vmatprep.subr.mxu0 0.0
    %252 = vmatpush1.msra.mxu0 0.0
    %253 = vmatprep.subr.mxu0 0.0
    %254 = vmatpush1.msra.mxu0 0.0
    %255 = vmatprep.subr.mxu0 0.0
    %256 = vmatpush1.msra.mxu0 0.0
    %257 = vmatprep.subr.mxu0 0.0
    %258 = vmatpush1.msra.mxu0 0.0
    %259 = vmatprep.subr.mxu0 0.0
    %260 = vmatpush1.msra.mxu0 0.0
    %261 = vmatprep.subr.mxu0 0.0
    %262 = vmatpush1.msra.mxu0 0.0
    %263 = vmatprep.subr.mxu0 0.0
    %264 = vmatpush1.msra.mxu0 0.0
    %265 = vmatprep.subr.mxu0 0.0
    %266 = vmatpush1.msra.mxu0 0.0
    %267 = vmatprep.subr.mxu0 0.0
    %268 = vmatpush1.msra.mxu0 0.0
    %269 = vmatprep.subr.mxu0 0.0
    %270 = vmatpush1.msra.mxu0 0.0
    %271 = vmatprep.subr.mxu0 0.0
    %272 = vmatpush1.msra.mxu0 0.0
    %273 = vmatprep.subr.mxu0 0.0
    %274 = vmatpush1.msra.mxu0 0.0
    %275 = vmatprep.subr.mxu0 0.0
    %276 = vmatpush1.msra.mxu0 0.0
    %277 = vmatprep.subr.mxu0 0.0
    %278 = vmatpush1.msra.mxu0 0.0
    %279 = vmatprep.subr.mxu0 0.0
    %280 = vmatpush1.msra.mxu0 0.0
    %281 = vmatprep.subr.mxu0 0.0
    %282 = vmatpush1.msra.mxu0 0.0
    %283 = vmatprep.subr.mxu0 0.0
    %284 = vmatpush1.msra.mxu0 0.0
    %285 = vmatprep.subr.mxu0 0.0
    %286 = vmatpush1.msra.mxu0 0.0
    %287 = vmatprep.subr.mxu0 0.0
    %288 = vmatpush1.msra.mxu0 0.0
    %289 = vmatprep.subr.mxu0 0.0
    %290 = vmatpush1.msra.mxu0 0.0
    %291 = vmatprep.subr.mxu0 0.0
    %292 = vmatpush1.msra.mxu0 0.0
    %293 = vmatprep.subr.mxu0 0.0
    %294 = vmatpush1.msra.mxu0 0.0
    %295 = vmatprep.subr.mxu0 0.0
    %296 = vmatpush1.msra.mxu0 0.0
    %297 = vmatprep.subr.mxu0 0.0
    %298 = vmatpush1.msra.mxu0 0.0
    %299 = vmatprep.mubr.f32.mxu0 0.0
    %300 = vmatmul.mubr.f32.gmra.mrb[0].mxu0 %v230
    %v301 = vpop.f32.mrb[0].mxu0
    %v302 = vadd.f32 %v227, %v301
    %v303 = vpop.f32.mrb[0].mxu0
    %304 = vmatprep.mubr.f32.mxu0 0.0
    %305 = vmatmul.mubr.f32.gmra.mrb[0].mxu0 %v233
    %v306 = vpop.f32.mrb[0].mxu0
    %v307 = vadd.f32 %v227, %v306
    %v308 = vpop.f32.mrb[0].mxu0
    %309 = vdwg.mxu0
    %310 = vst.msk [vmem:[#allocation2] sm:$0xff] %vm134, %v302
    %311 = vst.msk [vmem:[#allocation2 + $0x8] sm:$0xff] %vm134, %v307
    // Predicated region
    $region30: #{time_feature_spg_forward.1} parent=1 // pred_check
      _
    $region31: #{time_feature_spg_forward.1} parent=1 // pred_check_branch
      %313 = sbr.rel (0) target = $region33
    $region32: #{time_feature_spg_forward.1} parent=1 // pred_region
      %s315 = ssub.s32 256, 256
      %316 = vsyncadd [#allocation3], %s315
      %s317 = sshll.u32 [#allocation2], 4
      %s318 = int_to_ptr.vmem [resolvable:$true] %s317
      %323 = dma.vmem_to_hbm [thread:$0]  %s318, 256, %s7, [#allocation3], 128, 128, 8
    $region33: #{time_feature_spg_forward.1} parent=1 // pred_fallthru
      _
    // Predicated region
    $region34: #{time_feature_spg_forward.1} parent=1 // pred_check
      _
    $region35: #{time_feature_spg_forward.1} parent=1 // pred_check_branch
      %325 = sbr.rel (0) target = $region37
    $region36: #{time_feature_spg_forward.1} parent=1 // pred_region
      %326 = dma.done [#allocation3], 256
    $region37: #{time_feature_spg_forward.1} parent=1 // pred_fallthru
      _
    %327 = vsyncpa [#allocation3], 1

</llo_original>
